<compile_context>
chip_gen: v5e
topology: v5e:2x2
jax: 0.10.0
libtpu: 0.0.40
codegen_flags: <defaults>
</compile_context>

<pallas_src>
import functools

import jax
import jax.numpy as jnp
import numpy as np
from jax.experimental import pallas as pl
from jax.experimental.pallas import tpu as pltpu


# ----------------------------- kernel helpers ------------------------------

def _min3(a, b, c):
    return jnp.minimum(jnp.minimum(a, b), c)


def _max3(a, b, c):
    return jnp.maximum(jnp.maximum(a, b), c)


def _med3(a, b, c):
    lo = jnp.minimum(a, b)
    hi = jnp.maximum(a, b)
    return jnp.maximum(lo, jnp.minimum(hi, c))


def _reflect_pad(x, axis_h, axis_w, pads):
    """Reflect-pad (torch 'reflect': no edge repeat) along two axes.

    Pads are static Python ints (< dim), so this lowers to static slices plus
    a single concatenate per axis -- built entirely in VMEM (no extra HBM pass).
    """
    p_l, p_r, p_t, p_b = pads

    def _row(a, axis, i):
        sl = [slice(None)] * a.ndim
        sl[axis] = slice(i, i + 1)
        return a[tuple(sl)]

    if p_t or p_b:
        n = x.shape[axis_h]
        x = jnp.concatenate(
            [_row(x, axis_h, p_t - j) for j in range(p_t)]
            + [x]
            + [_row(x, axis_h, n - 2 - j) for j in range(p_b)],
            axis=axis_h)
    if p_l or p_r:
        n = x.shape[axis_w]
        x = jnp.concatenate(
            [_row(x, axis_w, p_l - j) for j in range(p_l)]
            + [x]
            + [_row(x, axis_w, n - 2 - j) for j in range(p_r)],
            axis=axis_w)
    return x


def _median_of_rows(r0, r1, r2, wo, w_axis):
    """Exact 3x3 median from three vertically shifted full-width planes."""
    mn01 = jnp.minimum(r0, r1)
    mx01 = jnp.maximum(r0, r1)
    lo = jnp.minimum(mn01, r2)                        # per-column minimum
    hi = jnp.maximum(mx01, r2)                        # per-column maximum
    mid = jnp.maximum(mn01, jnp.minimum(mx01, r2))    # per-column median

    def win(p, dj):
        sl = [slice(None)] * p.ndim
        sl[w_axis] = slice(dj, dj + wo)
        return p[tuple(sl)]

    col_max = _max3(win(lo, 0), win(lo, 1), win(lo, 2))
    col_med = _med3(win(mid, 0), win(mid, 1), win(mid, 2))
    col_min = _min3(win(hi, 0), win(hi, 1), win(hi, 2))
    return _med3(col_max, col_med, col_min)


def _median3x3_nc_kernel(x_ref, o_ref, *, pads):
    """Batch-leading layout: x_ref (B, H, W) unpadded -> o_ref (B, Ho, Wo)."""
    ho, wo = o_ref.shape[1], o_ref.shape[2]
    if any(pads):
        x = _reflect_pad(x_ref[...], axis_h=1, axis_w=2, pads=pads)
        r0, r1, r2 = x[:, 0:ho, :], x[:, 1:ho + 1, :], x[:, 2:ho + 2, :]
    else:
        # Direct ref slices: never keep the full block + 3 shifted copies live.
        r0 = x_ref[:, 0:ho, :]
        r1 = x_ref[:, 1:ho + 1, :]
        r2 = x_ref[:, 2:ho + 2, :]
    o_ref[...] = _median_of_rows(r0, r1, r2, wo, w_axis=2).astype(o_ref.dtype)


def _median3x3_cl_kernel(x_ref, o_ref, *, pads):
    """Channels-last (lane-dense) layout: x_ref (H, W, C) -> o_ref (Ho, Wo, C).

    H shifts are leading-dim address offsets, W shifts are sublane offsets, and
    every store is a full 128-lane vst (C is a multiple of 128 per block).
    """
    ho, wo = o_ref.shape[0], o_ref.shape[1]
    if any(pads):
        x = _reflect_pad(x_ref[...], axis_h=0, axis_w=1, pads=pads)
        r0, r1, r2 = x[0:ho, :, :], x[1:ho + 1, :, :], x[2:ho + 2, :, :]
    else:
        r0 = x_ref[0:ho, :, :]
        r1 = x_ref[1:ho + 1, :, :]
        r2 = x_ref[2:ho + 2, :, :]
    o_ref[...] = _median_of_rows(r0, r1, r2, wo, w_axis=1).astype(o_ref.dtype)


# ----------------------------- wrapper helpers ------------------------------

def _resolve_padding(h, w, kernel_size, stride, padding, same):
    kh = kw = kernel_size
    sh = sw = stride
    if same:
        ph = max(kh - sh, 0) if h % sh == 0 else max(kh - h % sh, 0)
        pw = max(kw - sw, 0) if w % sw == 0 else max(kw - w % sw, 0)
        p_l = pw // 2
        p_r = pw - p_l
        p_t = ph // 2
        p_b = ph - p_t
        return (p_l, p_r, p_t, p_b)
    if isinstance(padding, int):
        return (padding,) * 4
    return tuple(padding)


def _vmem_capacity_bytes():
    try:
        return int(pltpu.get_tpu_info().vmem_capacity_bytes)
    except Exception:
        return 64 * 1024 * 1024   # conservative: v7x per-TensorCore VMEM


def _vmem_limit(block_bytes, vmem_cap):
    want = max(32 << 20, 2 * int(block_bytes))
    return int(min(max(vmem_cap * 3 // 4, 32 << 20), want))


def _pick_block_batch(nc, per_img_bytes, budget_bytes):
    bb = max(1, min(nc, budget_bytes // max(per_img_bytes, 1)))
    if nc >= 2:
        bb = min(bb, (nc + 1) // 2)   # grid >= 2: keep both v7x TCs busy
    return int(bb)


def _pick_block_channels(nc, per_img_bytes, budget_bytes):
    n128 = pl.cdiv(nc, 128)           # lane groups of 128 channels
    g = max(1, min(n128, budget_bytes // max(per_img_bytes * 128, 1)))
    if n128 >= 2:
        g = min(g, (n128 + 1) // 2)   # grid >= 2 for v7x megacore
    return int(g) * 128


# --------------------------------- wrapper ----------------------------------

def median_pool2d(x, kernel_size=3, stride=1, padding=0, same=False):
    """Pallas implementation of MedianPool2d.forward for k=3, stride=1 (NCHW)."""
    assert kernel_size == 3 and stride == 1, "kernel implemented for k=3, stride=1"
    n, c, h, w = x.shape
    pads = _resolve_padding(h, w, kernel_size, stride, padding, same)
    p_l, p_r, p_t, p_b = pads
    assert p_t < h and p_b < h and p_l < w and p_r < w, "reflect pad must be < dim"
    hp, wp = h + p_t + p_b, w + p_l + p_r
    ho, wo = hp - 2, wp - 2
    assert hp >= 3 and wp >= 3, "padded spatial dims must be >= kernel size"

    nc = n * c
    itemsize = jnp.dtype(x.dtype).itemsize
    vmem_cap = _vmem_capacity_bytes()
    budget = max(vmem_cap // 8, 4 << 20)   # bytes of resident block (I/O + temps)

    in_e, out_e, pad_e = h * w, ho * wo, hp * wp
    # double-buffered in+out blocks + ~5 live full-size temps (padded/lo/mid/hi/res)
    per_img = (2 * (in_e + out_e) + 5 * pad_e) * itemsize

    xr = x.reshape(nc, h, w)

    # Lane-dense channels-last layout only when it actually helps: many channels,
    # narrow images, and a 128-channel block still fits the VMEM budget.
    use_cl = (nc >= 128) and (wp < 128) and (128 * per_img <= budget)

    if use_cl:
        bbc = _pick_block_channels(nc, per_img, budget)
        grid = (pl.cdiv(nc, bbc),)
        x_cl = xr.transpose(1, 2, 0)                       # (H, W, NC)
        kern = functools.partial(_median3x3_cl_kernel, pads=pads)
        blk_bytes = bbc * per_img
        out_cl = pl.pallas_call(
            kern,
            out_shape=jax.ShapeDtypeStruct((ho, wo, nc), x.dtype),
            grid_spec=pltpu.PrefetchScalarGridSpec(
                num_scalar_prefetch=0,
                grid=grid,
                in_specs=[pl.BlockSpec((h, w, bbc), lambda i: (0, 0, i))],
                out_specs=pl.BlockSpec((ho, wo, bbc), lambda i: (0, 0, i)),
            ),
            compiler_params=pltpu.CompilerParams(
                dimension_semantics=("parallel",),
                vmem_limit_bytes=_vmem_limit(blk_bytes, vmem_cap),
            ),
        )(x_cl)
        out = out_cl.transpose(2, 0, 1)                    # (NC, Ho, Wo)
    else:
        bb = _pick_block_batch(nc, per_img, budget)
        grid = (pl.cdiv(nc, bb),)
        kern = functools.partial(_median3x3_nc_kernel, pads=pads)
        blk_bytes = bb * per_img
        out = pl.pallas_call(
            kern,
            out_shape=jax.ShapeDtypeStruct((nc, ho, wo), x.dtype),
            grid_spec=pltpu.PrefetchScalarGridSpec(
                num_scalar_prefetch=0,
                grid=grid,
                in_specs=[pl.BlockSpec((bb, h, w), lambda i: (i, 0, 0))],
                out_specs=pl.BlockSpec((bb, ho, wo), lambda i: (i, 0, 0)),
            ),
            compiler_params=pltpu.CompilerParams(
                dimension_semantics=("parallel",),
                vmem_limit_bytes=_vmem_limit(blk_bytes, vmem_cap),
            ),
        )(xr)

    return out.reshape(n, c, ho, wo)


# ------------------------------ pure-JAX reference --------------------------

def median_pool2d_ref(x, kernel_size=3, stride=1, padding=0, same=False):
    """Pure-JAX reference (unfold + median), mirrors the PyTorch forward."""
    n, c, h, w = x.shape
    p_l, p_r, p_t, p_b = _resolve_padding(h, w, kernel_size, stride, padding, same)
    if p_l or p_r or p_t or p_b:
        x = jnp.pad(x, ((0, 0), (0, 0), (p_t, p_b), (p_l, p_r)), mode="reflect")
    hp, wp = h + p_t + p_b, w + p_l + p_r
    ho, wo = hp - (kernel_size - 1), wp - (kernel_size - 1)
    wins = jnp.stack(
        [x[:, :, di:di + ho, dj:dj + wo]
         for di in range(kernel_size) for dj in range(kernel_size)],
        axis=-1,
    )
    # Odd window (9 elems): torch .median(dim=-1)[0] == true median.
    return jnp.median(wins, axis=-1)


# ----------------------------------- tests ----------------------------------

if __name__ == "__main__":
    key = jax.random.PRNGKey(0)
    k0, k1, k2 = jax.random.split(key, 3)
    x = jax.random.normal(k0, (2, 4, 16, 16), dtype=jnp.float32)

    # Module defaults: kernel_size=3, stride=1, padding=0, same=False -> (2,4,14,14)
    out = jax.block_until_ready(median_pool2d(x))
    np.testing.assert_allclose(np.asarray(out), np.asarray(median_pool2d_ref(x)),
                               rtol=0, atol=0)
    assert out.shape == (2, 4, 14, 14)

    # 'same' reflect padding (fused into the kernel) -> (2,4,16,16)
    out_same = jax.block_until_ready(median_pool2d(x, same=True))
    np.testing.assert_allclose(np.asarray(out_same),
                               np.asarray(median_pool2d_ref(x, same=True)),
                               rtol=0, atol=0)
    assert out_same.shape == (2, 4, 16, 16)

    # Explicit integer padding (fused) -> (2,4,18,18)
    out_p = jax.block_until_ready(median_pool2d(x, padding=2))
    np.testing.assert_allclose(np.asarray(out_p),
                               np.asarray(median_pool2d_ref(x, padding=2)),
                               rtol=0, atol=0)
    assert out_p.shape == (2, 4, 18, 18)

    # Awkward N*C (cdiv grid, partial last block) + odd spatial dims, 'same'
    x2 = jax.random.normal(k1, (1, 3, 17, 19), dtype=jnp.float32)
    out2 = jax.block_until_ready(median_pool2d(x2, same=True))
    np.testing.assert_allclose(np.asarray(out2),
                               np.asarray(median_pool2d_ref(x2, same=True)),
                               rtol=0, atol=0)
    assert out2.shape == (1, 3, 17, 19)

    # Lane-dense channels-last path (N*C >= 128, W < 128), 'same'
    x3 = jax.random.normal(k2, (2, 64, 16, 16), dtype=jnp.float32)
    out3 = jax.block_until_ready(median_pool2d(x3, same=True))
    np.testing.assert_allclose(np.asarray(out3),
                               np.asarray(median_pool2d_ref(x3, same=True)),
                               rtol=0, atol=0)
    assert out3.shape == (2, 64, 16, 16)

    print("KERNEL_OK")
</pallas_src>

<mosaic_0001>
module attributes {stable_mosaic.version = 11 : i64} {
  func.func @_median3x3_nc_kernel(%arg0: i32, %arg1: memref<4x16x16xf32, #tpu.memory_space<vmem>>, %arg2: memref<4x14x14xf32, #tpu.memory_space<vmem>>) attributes {dimension_semantics = [#tpu.dimension_semantics<parallel>], iteration_bounds = array<i64: 2>, scalar_prefetch = 0 : i64, scratch_operands = 0 : i64, tpu.core_type = #tpu.core_type<tc>, window_params = [{transform_indices = @transform_0, window_bounds = array<i64: 4, 16, 16>}, {transform_indices = @transform_1, window_bounds = array<i64: 4, 14, 14>}]} {
    %c0 = arith.constant 0 : index
    %c0_0 = arith.constant 0 : index
    %c0_1 = arith.constant 0 : index
    %0 = vector.load %arg1[%c0, %c0_0, %c0_1] : memref<4x16x16xf32, #tpu.memory_space<vmem>>, vector<4x14x16xf32>
    %c0_2 = arith.constant 0 : index
    %c1 = arith.constant 1 : index
    %c0_3 = arith.constant 0 : index
    %1 = vector.load %arg1[%c0_2, %c1, %c0_3] : memref<4x16x16xf32, #tpu.memory_space<vmem>>, vector<4x14x16xf32>
    %c0_4 = arith.constant 0 : index
    %c2 = arith.constant 2 : index
    %c0_5 = arith.constant 0 : index
    %2 = vector.load %arg1[%c0_4, %c2, %c0_5] : memref<4x16x16xf32, #tpu.memory_space<vmem>>, vector<4x14x16xf32>
    %3 = arith.minimumf %0, %1 : vector<4x14x16xf32>
    %4 = arith.maximumf %0, %1 : vector<4x14x16xf32>
    %5 = arith.minimumf %3, %2 : vector<4x14x16xf32>
    %6 = arith.maximumf %4, %2 : vector<4x14x16xf32>
    %7 = arith.minimumf %4, %2 : vector<4x14x16xf32>
    %8 = arith.maximumf %3, %7 : vector<4x14x16xf32>
    %9 = vector.extract_strided_slice %5 {offsets = [0, 0, 0], sizes = [4, 14, 14], strides = [1, 1, 1]} : vector<4x14x16xf32> to vector<4x14x14xf32>
    %10 = vector.extract_strided_slice %5 {offsets = [0, 0, 1], sizes = [4, 14, 14], strides = [1, 1, 1]} : vector<4x14x16xf32> to vector<4x14x14xf32>
    %11 = vector.extract_strided_slice %5 {offsets = [0, 0, 2], sizes = [4, 14, 14], strides = [1, 1, 1]} : vector<4x14x16xf32> to vector<4x14x14xf32>
    %12 = arith.maximumf %9, %10 : vector<4x14x14xf32>
    %13 = arith.maximumf %12, %11 : vector<4x14x14xf32>
    %14 = vector.extract_strided_slice %8 {offsets = [0, 0, 0], sizes = [4, 14, 14], strides = [1, 1, 1]} : vector<4x14x16xf32> to vector<4x14x14xf32>
    %15 = vector.extract_strided_slice %8 {offsets = [0, 0, 1], sizes = [4, 14, 14], strides = [1, 1, 1]} : vector<4x14x16xf32> to vector<4x14x14xf32>
    %16 = vector.extract_strided_slice %8 {offsets = [0, 0, 2], sizes = [4, 14, 14], strides = [1, 1, 1]} : vector<4x14x16xf32> to vector<4x14x14xf32>
    %17 = arith.minimumf %14, %15 : vector<4x14x14xf32>
    %18 = arith.maximumf %14, %15 : vector<4x14x14xf32>
    %19 = arith.minimumf %18, %16 : vector<4x14x14xf32>
    %20 = arith.maximumf %17, %19 : vector<4x14x14xf32>
    %21 = vector.extract_strided_slice %6 {offsets = [0, 0, 0], sizes = [4, 14, 14], strides = [1, 1, 1]} : vector<4x14x16xf32> to vector<4x14x14xf32>
    %22 = vector.extract_strided_slice %6 {offsets = [0, 0, 1], sizes = [4, 14, 14], strides = [1, 1, 1]} : vector<4x14x16xf32> to vector<4x14x14xf32>
    %23 = vector.extract_strided_slice %6 {offsets = [0, 0, 2], sizes = [4, 14, 14], strides = [1, 1, 1]} : vector<4x14x16xf32> to vector<4x14x14xf32>
    %24 = arith.minimumf %21, %22 : vector<4x14x14xf32>
    %25 = arith.minimumf %24, %23 : vector<4x14x14xf32>
    %26 = arith.minimumf %13, %20 : vector<4x14x14xf32>
    %27 = arith.maximumf %13, %20 : vector<4x14x14xf32>
    %28 = arith.minimumf %27, %25 : vector<4x14x14xf32>
    %29 = arith.maximumf %26, %28 : vector<4x14x14xf32>
    %c0_6 = arith.constant 0 : index
    %c0_7 = arith.constant 0 : index
    %c0_8 = arith.constant 0 : index
    %30 = vector.load %arg2[%c0_6, %c0_7, %c0_8] : memref<4x14x14xf32, #tpu.memory_space<vmem>>, vector<4x14x14xf32>
    tpu.vector_store %arg2[%c0_6, %c0_7, %c0_8], %29 {strides = array<i32>} : memref<4x14x14xf32, #tpu.memory_space<vmem>>, vector<4x14x14xf32>,
    return
  }
  func.func @transform_0(%arg0: i32) -> (i32, i32, i32) {
    %c0_i32 = arith.constant 0 : i32
    %c0_i32_0 = arith.constant 0 : i32
    %c0_i32_1 = arith.constant 0 : i32
    return %arg0, %c0_i32, %c0_i32_0 : i32, i32, i32
  }
  func.func @transform_1(%arg0: i32) -> (i32, i32, i32) {
    %c0_i32 = arith.constant 0 : i32
    %c0_i32_0 = arith.constant 0 : i32
    %c0_i32_1 = arith.constant 0 : i32
    return %arg0, %c0_i32, %c0_i32_0 : i32, i32, i32
  }
}

</mosaic_0001>

<llo_original>
// kernel: tpu_custom_call.1
$region0: #{tpu_custom_call.1}
  #allocation0 [shape = 'u32[]', space=smem, size = 0x4, offset = 0x4, fixed_abs, tag = 'smem constant byte address 0x4 - core index']
  #allocation1 [shape = 'u32[72,128]{1,0:T(1,128)}', space=vmem, size = 0x9000, scoped, tag = 'internal scratch']
  %s0 = inlined_call_operand.hbm [shape: f32[8,16,16], index: 0, kind: input, shape index: {}]
  %s1 = inlined_call_operand.vmem [shape: f32[8,14,14], index: 1, kind: output, shape index: {}]
  %s2 = sld [smem:[#allocation0]]
  $region41: #{tpu_custom_call.1} parent=0
    _
  %s4 = ssub.s32 1, %s2
  %s5 = scalar_select 0, %s4, %s2
  $region1: #{tpu_custom_call.1} parent=0
    #allocation2 [shape = 'u8[65536]{0}', space=vmem, size = 0x10000, scoped, tag = 'input window, operand 0']
    #allocation3 [shape = 's32[2]{0}', space=sflag, size = 0x8, scoped, tag = 'scoped memory for tpu_custom_call.1']
    %6 = vsyncpa [#allocation3], 0
    %s7 = scalar_lea.sflag [#allocation3], 1
    %8 = vsyncpa %s7, 0
    loop: start=0, step=1, limit=4
    $region2: #{tpu_custom_call.1} parent=1 // loop_pre_header
      _
    $region3: #{tpu_custom_call.1} parent=1 // loop_header
      %s10 = sphi 0, %s14
      %p11 = scmp.ge.s32.totalorder %s10, 4
      %s20 = sphi 0, %s22
      %s23 = sphi 0, %s20
      %s24 = sphi 0, %s23
      %s40 = sphi 0, %s24
      %s46 = sphi 0, %s48
      %s49 = sphi 0, %s46
      %s50 = sphi 0, %s49
      %s66 = sphi 0, %s50
    $region4: #{tpu_custom_call.1} parent=1 // loop_header_branch
      %13 = sbr.rel (%p11) target = $region8
    $region5: #{tpu_custom_call.1} parent=1 // loop_body
      %s15 = ssub.s32 %s10, 1
      %s16 = ssub.s32 %s10, 2
      %s17 = sadd.s32 %s10, 1
      %s18 = ssub.s32 %s10, %s17
      %p19 = scmp.eq.s32.totalorder %s18, 0
      %s21 = sadd.s32 %s20, 1
      %s22 = scalar_select %p19, %s20, %s21
      %p25 = pneg %p19
      %p26 = scmp.eq.s32.totalorder %s10, 1
      %p27 = por %p25, %p26
      %p28 = scmp.ne.s32.totalorder %s20, %s23
      %p29 = scmp.eq.s32.totalorder %s10, 0
      %p30 = por %p28, %p29
      %p31 = scmp.ne.s32.totalorder %s20, %s23
      %p32 = scmp.eq.s32.totalorder %s15, 1
      %p33 = por %p31, %p32
      %p34 = scmp.ne.s32.totalorder %s23, %s24
      %p35 = scmp.eq.s32.totalorder %s15, 0
      %p36 = por %p34, %p35
      %p37 = scmp.ne.s32.totalorder %s23, %s24
      %p38 = scmp.eq.s32.totalorder %s16, 1
      %p39 = por %p37, %p38
      %p41 = scmp.ne.s32.totalorder %s24, %s40
      %p42 = scmp.eq.s32.totalorder %s16, 0
      %p43 = por %p41, %p42
      %s44 = ssub.s32 %s10, %s17
      %p45 = scmp.eq.s32.totalorder %s44, 0
      %s47 = sadd.s32 %s46, 1
      %s48 = scalar_select %p45, %s46, %s47
      %p51 = pneg %p45
      %p52 = scmp.eq.s32.totalorder %s10, 1
      %p53 = por %p51, %p52
      %p54 = scmp.ne.s32.totalorder %s46, %s49
      %p55 = scmp.eq.s32.totalorder %s10, 0
      %p56 = por %p54, %p55
      %p57 = scmp.ne.s32.totalorder %s46, %s49
      %p58 = scmp.eq.s32.totalorder %s15, 1
      %p59 = por %p57, %p58
      %p60 = scmp.ne.s32.totalorder %s49, %s50
      %p61 = scmp.eq.s32.totalorder %s15, 0
      %p62 = por %p60, %p61
      %p63 = scmp.ne.s32.totalorder %s49, %s50
      %p64 = scmp.eq.s32.totalorder %s16, 1
      %p65 = por %p63, %p64
      %p67 = scmp.ne.s32.totalorder %s50, %s66
      %p68 = scmp.eq.s32.totalorder %s16, 0
      %p69 = por %p67, %p68
      %p70 = scmp.le.s32.totalorder 1, %s10
      %p71 = scmp.lt.s32.totalorder %s10, 3
      %p72 = pnand %p70, %p71
      %p73 = pneg %p72
      // Predicated region
      $region9: #{tpu_custom_call.1} parent=5 // pred_check
        _
      $region10: #{tpu_custom_call.1} parent=5 // pred_check_branch
        %75 = sbr.rel (%p72) target = $region12
      $region11: #{tpu_custom_call.1} parent=5 // pred_region
        %s76 = ssub.s32 %s10, 1
      $region12: #{tpu_custom_call.1} parent=5 // pred_fallthru
        _
      %p77 = scmp.lt.s32.totalorder %s10, 2
      // Predicated region
      $region13: #{tpu_custom_call.1} parent=5 // pred_check
        %p78 = pneg %p77
      $region14: #{tpu_custom_call.1} parent=5 // pred_check_branch
        %80 = sbr.rel (%p78) target = $region16
      $region15: #{tpu_custom_call.1} parent=5 // pred_region
        // Predicated region
        $region17: #{tpu_custom_call.1} parent=15 // pred_check
          %p81 = pneg %p30
        $region18: #{tpu_custom_call.1} parent=15 // pred_check_branch
          %83 = sbr.rel (%p81) target = $region20
        $region19: #{tpu_custom_call.1} parent=15 // pred_region
          %s84 = sand.u32 %s20, 1
          %s85 = scalar_lea.sflag [#allocation3], %s84
          %s86 = sand.u32 %s20, 1
          %s87 = smul.addr %s86, 64
          %s88 = scalar_lea.vmem [#allocation2], %s87
          %s89 = smul.u32 4, %s10
          %91 = vsyncadd %s85, 0
          %s92 = smul.addr %s89, 2
          %s93 = smul.addr %s92, 8
          %s94 = scalar_lea.hbm %s0, %s93
          %s95 = sshll.u32 %s94, 4
          %s96 = int_to_ptr.hbm [resolvable:$true] %s95
          %s97 = sshll.u32 %s88, 4
          %s98 = int_to_ptr.vmem [resolvable:$true] %s97
          %103 = dma.hbm_to_vmem [thread:$0]  %s96, 1024, %s98, %s85, 128, 128, 8
        $region20: #{tpu_custom_call.1} parent=15 // pred_fallthru
          _
      $region16: #{tpu_custom_call.1} parent=5 // pred_fallthru
        _
      %p104 = scmp.le.s32.totalorder 1, %s10
      %p105 = scmp.lt.s32.totalorder %s10, 3
      %p106 = pnand %p104, %p105
      %p107 = pneg %p106
      // Predicated region
      $region21: #{tpu_custom_call.1} parent=5 // pred_check
        _
      $region22: #{tpu_custom_call.1} parent=5 // pred_check_branch
        %109 = sbr.rel (%p106) target = $region24
      $region23: #{tpu_custom_call.1} parent=5 // pred_region
        %s110 = ssub.s32 %s10, 1
        %s111 = sand.u32 %s23, 1
        %s112 = scalar_lea.sflag [#allocation3], %s111
        %s113 = sand.u32 %s23, 1
        %s114 = smul.addr %s113, 64
        %s115 = scalar_lea.vmem [#allocation2], %s114
        // Predicated region
        $region25: #{tpu_custom_call.1} parent=23 // pred_check
          %p116 = pneg %p36
        $region26: #{tpu_custom_call.1} parent=23 // pred_check_branch
          %118 = sbr.rel (%p116) target = $region28
        $region27: #{tpu_custom_call.1} parent=23 // pred_region
          %120 = dma.done %s112, 1024
        $region28: #{tpu_custom_call.1} parent=23 // pred_fallthru
          _
        %s121 = sand.u32 %s23, 1
        %s122 = scalar_lea.sflag [#allocation3], %s121
        %s123 = sand.u32 %s23, 1
        %s124 = smul.addr %s123, 64
        %s125 = scalar_lea.vmem [#allocation2], %s124
        %p126 = pneg %p36
        %p127 = pneg %p33
        %p128 = pneg %p62
        %p129 = pneg %p59
        %s130 = smul.u32 4, %s15
        %p131 = scmp.lt.s32.totalorder %s130, 7
        %s132 = scalar_select %p131, %s130, 7
        %s133 = smul.addr %s132, 2
        %s134 = smul.addr %s133, 8
        %s135 = scalar_lea.vmem %s1, %s134
        %s136 = smul.u32 4, %s15
        %s137 = smul.u32 4, %s15
        %p138 = scmp.lt.s32.totalorder %s137, 7
        %s139 = scalar_select %p138, %s137, 7
        %s140 = smul.addr %s139, 2
        %s141 = smul.addr %s140, 8
        %s142 = scalar_lea.vmem %s1, %s141
        %s143 = smul.u32 4, %s15
        %v144 = vld [vmem:[%s115] sm:$0xff]
        %v145 = vld [vmem:[%s115 + $0x8] sm:$0x3f]
        %v146 = vld [vmem:[%s115 + $0x10] sm:$0xff]
        %v147 = vld [vmem:[%s115 + $0x18] sm:$0x3f]
        %v148 = vld [vmem:[%s115 + $0x20] sm:$0xff]
        %v149 = vld [vmem:[%s115 + $0x28] sm:$0x3f]
        %v150 = vld [vmem:[%s115 + $0x30] sm:$0xff]
        %v151 = vld [vmem:[%s115 + $0x38] sm:$0x3f]
        %v152 = vld [vmem:[%s115 + $0x1] sm:$0xff]
        %v153 = vld [vmem:[%s115 + $0x9] sm:$0x3f]
        %v154 = vld [vmem:[%s115 + $0x11] sm:$0xff]
        %v155 = vld [vmem:[%s115 + $0x19] sm:$0x3f]
        %v156 = vld [vmem:[%s115 + $0x21] sm:$0xff]
        %v157 = vld [vmem:[%s115 + $0x29] sm:$0x3f]
        %v158 = vld [vmem:[%s115 + $0x31] sm:$0xff]
        %v159 = vld [vmem:[%s115 + $0x39] sm:$0x3f]
        %v160 = vld [vmem:[%s115 + $0x2] sm:$0xff]
        %v161 = vld [vmem:[%s115 + $0xa] sm:$0x3f]
        %v162 = vld [vmem:[%s115 + $0x12] sm:$0xff]
        %v163 = vld [vmem:[%s115 + $0x1a] sm:$0x3f]
        %v164 = vld [vmem:[%s115 + $0x22] sm:$0xff]
        %v165 = vld [vmem:[%s115 + $0x2a] sm:$0x3f]
        %v166 = vld [vmem:[%s115 + $0x32] sm:$0xff]
        %v167 = vld [vmem:[%s115 + $0x3a] sm:$0x3f]
        %v168 = vmin.f32 %v144, %v152
        %v169 = vmin.f32 %v145, %v153
        %v170 = vmin.f32 %v146, %v154
        %v171 = vmin.f32 %v147, %v155
        %v172 = vmin.f32 %v148, %v156
        %v173 = vmin.f32 %v149, %v157
        %v174 = vmin.f32 %v150, %v158
        %v175 = vmin.f32 %v151, %v159
        %v176 = vmax.f32 %v144, %v152
        %v177 = vmax.f32 %v145, %v153
        %v178 = vmax.f32 %v146, %v154
        %v179 = vmax.f32 %v147, %v155
        %v180 = vmax.f32 %v148, %v156
        %v181 = vmax.f32 %v149, %v157
        %v182 = vmax.f32 %v150, %v158
        %v183 = vmax.f32 %v151, %v159
        %v184 = vmin.f32 %v168, %v160
        %v185 = vmin.f32 %v169, %v161
        %v186 = vmin.f32 %v170, %v162
        %v187 = vmin.f32 %v171, %v163
        %v188 = vmin.f32 %v172, %v164
        %v189 = vmin.f32 %v173, %v165
        %v190 = vmin.f32 %v174, %v166
        %v191 = vmin.f32 %v175, %v167
        %v192 = vmax.f32 %v176, %v160
        %v193 = vmax.f32 %v177, %v161
        %v194 = vmax.f32 %v178, %v162
        %v195 = vmax.f32 %v179, %v163
        %v196 = vmax.f32 %v180, %v164
        %v197 = vmax.f32 %v181, %v165
        %v198 = vmax.f32 %v182, %v166
        %v199 = vmax.f32 %v183, %v167
        %v200 = vmin.f32 %v176, %v160
        %v201 = vmin.f32 %v177, %v161
        %v202 = vmin.f32 %v178, %v162
        %v203 = vmin.f32 %v179, %v163
        %v204 = vmin.f32 %v180, %v164
        %v205 = vmin.f32 %v181, %v165
        %v206 = vmin.f32 %v182, %v166
        %v207 = vmin.f32 %v183, %v167
        %v208 = vmax.f32 %v168, %v200
        %v209 = vmax.f32 %v169, %v201
        %v210 = vmax.f32 %v170, %v202
        %v211 = vmax.f32 %v171, %v203
        %v212 = vmax.f32 %v172, %v204
        %v213 = vmax.f32 %v173, %v205
        %v214 = vmax.f32 %v174, %v206
        %v215 = vmax.f32 %v175, %v207
        %224 = vrot.lane.b32.xlu0 %v184, 127
        %v225 = vpop.permute.xlu0 %224
        %226 = vrot.lane.b32.xlu0 %v185, 127
        %v227 = vpop.permute.xlu0 %226
        %228 = vrot.lane.b32.xlu0 %v186, 127
        %v229 = vpop.permute.xlu0 %228
        %230 = vrot.lane.b32.xlu0 %v187, 127
        %v231 = vpop.permute.xlu0 %230
        %232 = vrot.lane.b32.xlu0 %v188, 127
        %v233 = vpop.permute.xlu0 %232
        %234 = vrot.lane.b32.xlu0 %v189, 127
        %v235 = vpop.permute.xlu0 %234
        %236 = vrot.lane.b32.xlu0 %v190, 127
        %v237 = vpop.permute.xlu0 %236
        %238 = vrot.lane.b32.xlu0 %v191, 127
        %v239 = vpop.permute.xlu0 %238
        %v248 = vmax.f32 %v184, %v225
        %v249 = vmax.f32 %v185, %v227
        %v250 = vmax.f32 %v186, %v229
        %v251 = vmax.f32 %v187, %v231
        %v252 = vmax.f32 %v188, %v233
        %v253 = vmax.f32 %v189, %v235
        %v254 = vmax.f32 %v190, %v237
        %v255 = vmax.f32 %v191, %v239
        %256 = vrot.lane.b32.xlu0 %v184, 126
        %v257 = vpop.permute.xlu0 %256
        %258 = vrot.lane.b32.xlu0 %v185, 126
        %v259 = vpop.permute.xlu0 %258
        %260 = vrot.lane.b32.xlu0 %v186, 126
        %v261 = vpop.permute.xlu0 %260
        %262 = vrot.lane.b32.xlu0 %v187, 126
        %v263 = vpop.permute.xlu0 %262
        %264 = vrot.lane.b32.xlu0 %v188, 126
        %v265 = vpop.permute.xlu0 %264
        %266 = vrot.lane.b32.xlu0 %v189, 126
        %v267 = vpop.permute.xlu0 %266
        %268 = vrot.lane.b32.xlu0 %v190, 126
        %v269 = vpop.permute.xlu0 %268
        %270 = vrot.lane.b32.xlu0 %v191, 126
        %v271 = vpop.permute.xlu0 %270
        %v280 = vmax.f32 %v248, %v257
        %v281 = vmax.f32 %v249, %v259
        %v282 = vmax.f32 %v250, %v261
        %v283 = vmax.f32 %v251, %v263
        %v284 = vmax.f32 %v252, %v265
        %v285 = vmax.f32 %v253, %v267
        %v286 = vmax.f32 %v254, %v269
        %v287 = vmax.f32 %v255, %v271
        %296 = vrot.lane.b32.xlu0 %v208, 127
        %v297 = vpop.permute.xlu0 %296
        %298 = vrot.lane.b32.xlu0 %v209, 127
        %v299 = vpop.permute.xlu0 %298
        %300 = vrot.lane.b32.xlu0 %v210, 127
        %v301 = vpop.permute.xlu0 %300
        %302 = vrot.lane.b32.xlu0 %v211, 127
        %v303 = vpop.permute.xlu0 %302
        %304 = vrot.lane.b32.xlu0 %v212, 127
        %v305 = vpop.permute.xlu0 %304
        %306 = vrot.lane.b32.xlu0 %v213, 127
        %v307 = vpop.permute.xlu0 %306
        %308 = vrot.lane.b32.xlu0 %v214, 127
        %v309 = vpop.permute.xlu0 %308
        %310 = vrot.lane.b32.xlu0 %v215, 127
        %v311 = vpop.permute.xlu0 %310
        %v320 = vmin.f32 %v208, %v297
        %v321 = vmin.f32 %v209, %v299
        %v322 = vmin.f32 %v210, %v301
        %v323 = vmin.f32 %v211, %v303
        %v324 = vmin.f32 %v212, %v305
        %v325 = vmin.f32 %v213, %v307
        %v326 = vmin.f32 %v214, %v309
        %v327 = vmin.f32 %v215, %v311
        %v328 = vmax.f32 %v208, %v297
        %v329 = vmax.f32 %v209, %v299
        %v330 = vmax.f32 %v210, %v301
        %v331 = vmax.f32 %v211, %v303
        %v332 = vmax.f32 %v212, %v305
        %v333 = vmax.f32 %v213, %v307
        %v334 = vmax.f32 %v214, %v309
        %v335 = vmax.f32 %v215, %v311
        %336 = vrot.lane.b32.xlu0 %v208, 126
        %v337 = vpop.permute.xlu0 %336
        %338 = vrot.lane.b32.xlu0 %v209, 126
        %v339 = vpop.permute.xlu0 %338
        %340 = vrot.lane.b32.xlu0 %v210, 126
        %v341 = vpop.permute.xlu0 %340
        %342 = vrot.lane.b32.xlu0 %v211, 126
        %v343 = vpop.permute.xlu0 %342
        %344 = vrot.lane.b32.xlu0 %v212, 126
        %v345 = vpop.permute.xlu0 %344
        %346 = vrot.lane.b32.xlu0 %v213, 126
        %v347 = vpop.permute.xlu0 %346
        %348 = vrot.lane.b32.xlu0 %v214, 126
        %v349 = vpop.permute.xlu0 %348
        %350 = vrot.lane.b32.xlu0 %v215, 126
        %v351 = vpop.permute.xlu0 %350
        %v360 = vmin.f32 %v328, %v337
        %v361 = vmin.f32 %v329, %v339
        %v362 = vmin.f32 %v330, %v341
        %v363 = vmin.f32 %v331, %v343
        %v364 = vmin.f32 %v332, %v345
        %v365 = vmin.f32 %v333, %v347
        %v366 = vmin.f32 %v334, %v349
        %v367 = vmin.f32 %v335, %v351
        %v368 = vmax.f32 %v320, %v360
        %v369 = vmax.f32 %v321, %v361
        %v370 = vmax.f32 %v322, %v362
        %v371 = vmax.f32 %v323, %v363
        %v372 = vmax.f32 %v324, %v364
        %v373 = vmax.f32 %v325, %v365
        %v374 = vmax.f32 %v326, %v366
        %v375 = vmax.f32 %v327, %v367
        %384 = vrot.lane.b32.xlu0 %v192, 127
        %v385 = vpop.permute.xlu0 %384
        %386 = vrot.lane.b32.xlu0 %v193, 127
        %v387 = vpop.permute.xlu0 %386
        %388 = vrot.lane.b32.xlu0 %v194, 127
        %v389 = vpop.permute.xlu0 %388
        %390 = vrot.lane.b32.xlu0 %v195, 127
        %v391 = vpop.permute.xlu0 %390
        %392 = vrot.lane.b32.xlu0 %v196, 127
        %v393 = vpop.permute.xlu0 %392
        %394 = vrot.lane.b32.xlu0 %v197, 127
        %v395 = vpop.permute.xlu0 %394
        %396 = vrot.lane.b32.xlu0 %v198, 127
        %v397 = vpop.permute.xlu0 %396
        %398 = vrot.lane.b32.xlu0 %v199, 127
        %v399 = vpop.permute.xlu0 %398
        %v408 = vmin.f32 %v192, %v385
        %v409 = vmin.f32 %v193, %v387
        %v410 = vmin.f32 %v194, %v389
        %v411 = vmin.f32 %v195, %v391
        %v412 = vmin.f32 %v196, %v393
        %v413 = vmin.f32 %v197, %v395
        %v414 = vmin.f32 %v198, %v397
        %v415 = vmin.f32 %v199, %v399
        %416 = vrot.lane.b32.xlu0 %v192, 126
        %v417 = vpop.permute.xlu0 %416
        %418 = vrot.lane.b32.xlu0 %v193, 126
        %v419 = vpop.permute.xlu0 %418
        %420 = vrot.lane.b32.xlu0 %v194, 126
        %v421 = vpop.permute.xlu0 %420
        %422 = vrot.lane.b32.xlu0 %v195, 126
        %v423 = vpop.permute.xlu0 %422
        %424 = vrot.lane.b32.xlu0 %v196, 126
        %v425 = vpop.permute.xlu0 %424
        %426 = vrot.lane.b32.xlu0 %v197, 126
        %v427 = vpop.permute.xlu0 %426
        %428 = vrot.lane.b32.xlu0 %v198, 126
        %v429 = vpop.permute.xlu0 %428
        %430 = vrot.lane.b32.xlu0 %v199, 126
        %v431 = vpop.permute.xlu0 %430
        %v440 = vmin.f32 %v408, %v417
        %v441 = vmin.f32 %v409, %v419
        %v442 = vmin.f32 %v410, %v421
        %v443 = vmin.f32 %v411, %v423
        %v444 = vmin.f32 %v412, %v425
        %v445 = vmin.f32 %v413, %v427
        %v446 = vmin.f32 %v414, %v429
        %v447 = vmin.f32 %v415, %v431
        %v448 = vmin.f32 %v280, %v368
        %v449 = vmin.f32 %v281, %v369
        %v450 = vmin.f32 %v282, %v370
        %v451 = vmin.f32 %v283, %v371
        %v452 = vmin.f32 %v284, %v372
        %v453 = vmin.f32 %v285, %v373
        %v454 = vmin.f32 %v286, %v374
        %v455 = vmin.f32 %v287, %v375
        %v456 = vmax.f32 %v280, %v368
        %v457 = vmax.f32 %v281, %v369
        %v458 = vmax.f32 %v282, %v370
        %v459 = vmax.f32 %v283, %v371
        %v460 = vmax.f32 %v284, %v372
        %v461 = vmax.f32 %v285, %v373
        %v462 = vmax.f32 %v286, %v374
        %v463 = vmax.f32 %v287, %v375
        %v464 = vmin.f32 %v456, %v440
        %v465 = vmin.f32 %v457, %v441
        %v466 = vmin.f32 %v458, %v442
        %v467 = vmin.f32 %v459, %v443
        %v468 = vmin.f32 %v460, %v444
        %v469 = vmin.f32 %v461, %v445
        %v470 = vmin.f32 %v462, %v446
        %v471 = vmin.f32 %v463, %v447
        %v472 = vmax.f32 %v448, %v464
        %v473 = vmax.f32 %v449, %v465
        %v474 = vmax.f32 %v450, %v466
        %v475 = vmax.f32 %v451, %v467
        %v476 = vmax.f32 %v452, %v468
        %v477 = vmax.f32 %v453, %v469
        %v478 = vmax.f32 %v454, %v470
        %v479 = vmax.f32 %v455, %v471
        %vm480 = vcmask 113664
        %481 = vst.msk [vmem:[%s142] sm:$0xff] %vm480, %v472
        %vm482 = vcmask 111616
        %483 = vst.msk [vmem:[%s142 + $0x8] sm:$0x3f] %vm482, %v473
        %484 = vst.msk [vmem:[%s142 + $0x10] sm:$0xff] %vm480, %v474
        %485 = vst.msk [vmem:[%s142 + $0x18] sm:$0x3f] %vm482, %v475
        %486 = vst.msk [vmem:[%s142 + $0x20] sm:$0xff] %vm480, %v476
        %487 = vst.msk [vmem:[%s142 + $0x28] sm:$0x3f] %vm482, %v477
        %488 = vst.msk [vmem:[%s142 + $0x30] sm:$0xff] %vm480, %v478
        %489 = vst.msk [vmem:[%s142 + $0x38] sm:$0x3f] %vm482, %v479
        %s490 = smul.u32 4, %s15
        %p491 = scmp.lt.s32.totalorder %s490, 7
        %s492 = scalar_select %p491, %s490, 7
        %s493 = smul.addr %s492, 2
        %s494 = smul.addr %s493, 8
        %s495 = scalar_lea.vmem %s1, %s494
        // Predicated region
        $region29: #{tpu_custom_call.1} parent=23 // pred_check
          %p496 = pneg %p59
        $region30: #{tpu_custom_call.1} parent=23 // pred_check_branch
          %498 = sbr.rel (%p496) target = $region32
        $region31: #{tpu_custom_call.1} parent=23 // pred_region
          %s499 = smul.u32 4, %s15
        $region32: #{tpu_custom_call.1} parent=23 // pred_fallthru
          _
      $region24: #{tpu_custom_call.1} parent=5 // pred_fallthru
        _
      %p500 = scmp.le.s32.totalorder 2, %s10
      // Predicated region
      $region33: #{tpu_custom_call.1} parent=5 // pred_check
        %p501 = pneg %p500
      $region34: #{tpu_custom_call.1} parent=5 // pred_check_branch
        %503 = sbr.rel (%p501) target = $region36
      $region35: #{tpu_custom_call.1} parent=5 // pred_region
        %s504 = ssub.s32 %s10, 2
        // Predicated region
        $region37: #{tpu_custom_call.1} parent=35 // pred_check
          %p505 = pneg %p65
        $region38: #{tpu_custom_call.1} parent=35 // pred_check_branch
          %507 = sbr.rel (%p505) target = $region40
        $region39: #{tpu_custom_call.1} parent=35 // pred_region
          %s508 = smul.u32 4, %s16
          %p509 = scmp.lt.s32.totalorder %s508, 7
          %s510 = scalar_select %p509, %s508, 7
          %s511 = smul.addr %s510, 2
          %s512 = smul.addr %s511, 8
          %s513 = scalar_lea.vmem %s1, %s512
        $region40: #{tpu_custom_call.1} parent=35 // pred_fallthru
          _
      $region36: #{tpu_custom_call.1} parent=5 // pred_fallthru
        _
    $region6: #{tpu_custom_call.1} parent=1 // loop_footer
      %s14 = sadd.s32 1, %s10
    $region7: #{tpu_custom_call.1} parent=1 // loop_footer_branch
      %9 = sbr.rel target = $region3
    $region8: #{tpu_custom_call.1} parent=1 // loop_exit
      _
    %514 = vsyncpa [#allocation3], 1
    %s515 = scalar_lea.sflag [#allocation3], 1
    %516 = vsyncpa %s515, 1

</llo_original>
